<compile_context>
chip_gen: v7x
topology: tpu7x:2x2x1
jax: 0.10.0
libtpu: 0.0.40
codegen_flags: <defaults>
</compile_context>

<pallas_src>
import jax
import jax.numpy as jnp
from jax.experimental import pallas as pl
from jax.experimental.pallas import tpu as pltpu

ALPHA = 0.2
SIGMA_REC = 0.15


def latent_rnn_kernel(drive_ref, wrec_t_ref, out_ref):
    """Single-invocation recurrence.

    drive_ref : (T, B, n)  precomputed  u @ W_in^T + noise   (time-major)
    wrec_t_ref: (n, n)     W_rec^T
    out_ref   : (T, B, n)  states (time-major); out[0] == 0
    """
    T = out_ref.shape[0]
    B, n = out_ref.shape[1], out_ref.shape[2]

    w = wrec_t_ref[...]                      # (n, n), load once
    s = jnp.zeros((B, n), jnp.float32)       # states[:, 0, :] = 0
    out_ref[0] = s

    # T is a small compile-time constant -> fully unrolled static loop.
    for i in range(T - 1):
        pre = jnp.dot(s, w, preferred_element_type=jnp.float32) + drive_ref[i]
        s = (1.0 - ALPHA) * s + ALPHA * jnp.maximum(pre, 0.0)
        out_ref[i + 1] = s


def latent_net_forward(u, noise, w_rec, w_in):
    """u: (B, T, input_size), noise: (B, T, n); returns states (B, T, n)."""
    B, T, _ = u.shape
    n = w_rec.shape[0]

    u_f32 = u.astype(jnp.float32)
    noise_f32 = noise.astype(jnp.float32)
    w_rec_f32 = w_rec.astype(jnp.float32)
    w_in_f32 = w_in.astype(jnp.float32)

    # Hoisted input projection: no recurrence dependence, so do it once as a
    # single XLA GEMM instead of a per-step K=6 matmul inside the serial loop.
    drive = jnp.einsum("bti,ni->btn", u_f32, w_in_f32) + noise_f32   # (B, T, n)
    drive_tm = jnp.transpose(drive, (1, 0, 2))                       # (T, B, n)

    wrec_t = w_rec_f32.T                                             # (n, n)

    states_tm = pl.pallas_call(
        latent_rnn_kernel,
        out_shape=jax.ShapeDtypeStruct((T, B, n), jnp.float32),
        in_specs=[
            pl.BlockSpec(memory_space=pltpu.MemorySpace.VMEM),   # drive (T,B,n)
            pl.BlockSpec(memory_space=pltpu.MemorySpace.VMEM),   # W_rec^T (n,n)
        ],
        out_specs=pl.BlockSpec(memory_space=pltpu.MemorySpace.VMEM),
    )(drive_tm, wrec_t)

    return jnp.transpose(states_tm, (1, 0, 2))                       # (B, T, n)


def reference_forward(u, noise, w_rec, w_in):
    """Pure-JAX replica of the PyTorch loop, for verification."""
    B, T, _ = u.shape
    n = w_rec.shape[0]
    states = [jnp.zeros((B, n), jnp.float32)]
    for i in range(T - 1):
        s = states[-1]
        pre = s @ w_rec.T + u[:, i, :] @ w_in.T + noise[:, i, :]
        states.append((1.0 - ALPHA) * s + ALPHA * jnp.maximum(pre, 0.0))
    return jnp.stack(states, axis=1)


if __name__ == "__main__":
    # Small shapes consistent with the module.
    n = 32            # latent/hidden size
    N = 32            # (only used by cayley_transform / losses, not forward)
    input_size = 6
    batch = 4         # number of trials in this mini-batch
    T = 8             # sequence length

    key = jax.random.PRNGKey(0)
    k_rec, k_in, k_u, k_noise = jax.random.split(key, 4)

    # recurrent_layer.weight ~ N(0, 0.025), shape (n, n)
    w_rec = 0.025 * jax.random.normal(k_rec, (n, n), jnp.float32)

    # input_layer.weight ~ N(0.2, 0.1), shape (n, input_size), then connectivity mask:
    #   mask[:input_size, :input_size] = eye; W_in = mask * relu(W_in)
    w_in_raw = 0.2 + 0.1 * jax.random.normal(k_in, (n, input_size), jnp.float32)
    input_mask = jnp.zeros((n, input_size), jnp.float32)
    input_mask = input_mask.at[:input_size, :input_size].set(jnp.eye(input_size))
    w_in = input_mask * jnp.maximum(w_in_raw, 0.0)

    # Example input u: (batch, T, input_size)
    u = jax.random.normal(k_u, (batch, T, input_size), jnp.float32)

    # Noise exactly as in forward(): sqrt(2*alpha*sigma_rec^2) * N(0, 1), shape (B, T, n)
    # TODO(synk): PyTorch samples this noise inside forward(); here it is sampled
    # host-side and passed in so the kernel is deterministic/verifiable.
    noise = jnp.sqrt(2.0 * ALPHA * SIGMA_REC ** 2) * jax.random.normal(
        k_noise, (batch, T, n), jnp.float32
    )

    states = latent_net_forward(u, noise, w_rec, w_in)
    states = jax.block_until_ready(states)

    ref = reference_forward(u, noise, w_rec, w_in)
    assert states.shape == (batch, T, n)
    assert jnp.allclose(states, ref, atol=1e-5, rtol=1e-5)

    print("KERNEL_OK")
</pallas_src>

<mosaic_0001>
module attributes {stable_mosaic.version = 11 : i64} {
  func.func @latent_rnn_kernel(%arg0: memref<8x4x32xf32, #tpu.memory_space<vmem>>, %arg1: memref<32x32xf32, #tpu.memory_space<vmem>>, %arg2: memref<8x4x32xf32, #tpu.memory_space<vmem>>) attributes {dimension_semantics = [], scalar_prefetch = 0 : i64, scratch_operands = 0 : i64, tpu.core_type = #tpu.core_type<tc>} {
    %c0 = arith.constant 0 : index
    %c0_0 = arith.constant 0 : index
    %0 = vector.load %arg1[%c0, %c0_0] : memref<32x32xf32, #tpu.memory_space<vmem>>, vector<32x32xf32>
    %cst = arith.constant 0.000000e+00 : f32
    %1 = vector.broadcast %cst : f32 to vector<4x32xf32>
    %c0_1 = arith.constant 0 : index
    %c0_2 = arith.constant 0 : index
    %c0_3 = arith.constant 0 : index
    %2 = vector.load %arg2[%c0_1, %c0_2, %c0_3] : memref<8x4x32xf32, #tpu.memory_space<vmem>>, vector<1x4x32xf32>
    %3 = vector.shape_cast %2 : vector<1x4x32xf32> to vector<4x32xf32>
    %4 = vector.shape_cast %1 : vector<4x32xf32> to vector<1x4x32xf32>
    tpu.vector_store %arg2[%c0_1, %c0_2, %c0_3], %4 {strides = array<i32>} : memref<8x4x32xf32, #tpu.memory_space<vmem>>, vector<1x4x32xf32>,
    %cst_4 = arith.constant dense<0.000000e+00> : vector<4x32xf32>
    %5 = tpu.matmul %1, %0, %cst_4 {dimension_numbers = #tpu.dot_dimension_numbers<[1], [0], [0], [1], [0, 0, 1, 1], [], []>} : vector<4x32xf32>, vector<32x32xf32>, vector<4x32xf32> -> vector<4x32xf32>
    %c0_5 = arith.constant 0 : index
    %c0_6 = arith.constant 0 : index
    %c0_7 = arith.constant 0 : index
    %6 = vector.load %arg0[%c0_5, %c0_6, %c0_7] : memref<8x4x32xf32, #tpu.memory_space<vmem>>, vector<1x4x32xf32>
    %7 = vector.shape_cast %6 : vector<1x4x32xf32> to vector<4x32xf32>
    %8 = arith.addf %5, %7 : vector<4x32xf32>
    %cst_8 = arith.constant 8.000000e-01 : f32
    %9 = vector.broadcast %cst_8 : f32 to vector<4x32xf32>
    %10 = arith.mulf %9, %1 : vector<4x32xf32>
    %cst_9 = arith.constant 0.000000e+00 : f32
    %11 = vector.broadcast %cst_9 : f32 to vector<4x32xf32>
    %12 = arith.maximumf %8, %11 : vector<4x32xf32>
    %cst_10 = arith.constant 2.000000e-01 : f32
    %13 = vector.broadcast %cst_10 : f32 to vector<4x32xf32>
    %14 = arith.mulf %13, %12 : vector<4x32xf32>
    %15 = arith.addf %10, %14 : vector<4x32xf32>
    %c1 = arith.constant 1 : index
    %c0_11 = arith.constant 0 : index
    %c0_12 = arith.constant 0 : index
    %16 = vector.load %arg2[%c1, %c0_11, %c0_12] : memref<8x4x32xf32, #tpu.memory_space<vmem>>, vector<1x4x32xf32>
    %17 = vector.shape_cast %16 : vector<1x4x32xf32> to vector<4x32xf32>
    %18 = vector.shape_cast %15 : vector<4x32xf32> to vector<1x4x32xf32>
    tpu.vector_store %arg2[%c1, %c0_11, %c0_12], %18 {strides = array<i32>} : memref<8x4x32xf32, #tpu.memory_space<vmem>>, vector<1x4x32xf32>,
    %cst_13 = arith.constant dense<0.000000e+00> : vector<4x32xf32>
    %19 = tpu.matmul %15, %0, %cst_13 {dimension_numbers = #tpu.dot_dimension_numbers<[1], [0], [0], [1], [0, 0, 1, 1], [], []>} : vector<4x32xf32>, vector<32x32xf32>, vector<4x32xf32> -> vector<4x32xf32>
    %c1_14 = arith.constant 1 : index
    %c0_15 = arith.constant 0 : index
    %c0_16 = arith.constant 0 : index
    %20 = vector.load %arg0[%c1_14, %c0_15, %c0_16] : memref<8x4x32xf32, #tpu.memory_space<vmem>>, vector<1x4x32xf32>
    %21 = vector.shape_cast %20 : vector<1x4x32xf32> to vector<4x32xf32>
    %22 = arith.addf %19, %21 : vector<4x32xf32>
    %cst_17 = arith.constant 8.000000e-01 : f32
    %23 = vector.broadcast %cst_17 : f32 to vector<4x32xf32>
    %24 = arith.mulf %23, %15 : vector<4x32xf32>
    %cst_18 = arith.constant 0.000000e+00 : f32
    %25 = vector.broadcast %cst_18 : f32 to vector<4x32xf32>
    %26 = arith.maximumf %22, %25 : vector<4x32xf32>
    %cst_19 = arith.constant 2.000000e-01 : f32
    %27 = vector.broadcast %cst_19 : f32 to vector<4x32xf32>
    %28 = arith.mulf %27, %26 : vector<4x32xf32>
    %29 = arith.addf %24, %28 : vector<4x32xf32>
    %c2 = arith.constant 2 : index
    %c0_20 = arith.constant 0 : index
    %c0_21 = arith.constant 0 : index
    %30 = vector.load %arg2[%c2, %c0_20, %c0_21] : memref<8x4x32xf32, #tpu.memory_space<vmem>>, vector<1x4x32xf32>
    %31 = vector.shape_cast %30 : vector<1x4x32xf32> to vector<4x32xf32>
    %32 = vector.shape_cast %29 : vector<4x32xf32> to vector<1x4x32xf32>
    tpu.vector_store %arg2[%c2, %c0_20, %c0_21], %32 {strides = array<i32>} : memref<8x4x32xf32, #tpu.memory_space<vmem>>, vector<1x4x32xf32>,
    %cst_22 = arith.constant dense<0.000000e+00> : vector<4x32xf32>
    %33 = tpu.matmul %29, %0, %cst_22 {dimension_numbers = #tpu.dot_dimension_numbers<[1], [0], [0], [1], [0, 0, 1, 1], [], []>} : vector<4x32xf32>, vector<32x32xf32>, vector<4x32xf32> -> vector<4x32xf32>
    %c2_23 = arith.constant 2 : index
    %c0_24 = arith.constant 0 : index
    %c0_25 = arith.constant 0 : index
    %34 = vector.load %arg0[%c2_23, %c0_24, %c0_25] : memref<8x4x32xf32, #tpu.memory_space<vmem>>, vector<1x4x32xf32>
    %35 = vector.shape_cast %34 : vector<1x4x32xf32> to vector<4x32xf32>
    %36 = arith.addf %33, %35 : vector<4x32xf32>
    %cst_26 = arith.constant 8.000000e-01 : f32
    %37 = vector.broadcast %cst_26 : f32 to vector<4x32xf32>
    %38 = arith.mulf %37, %29 : vector<4x32xf32>
    %cst_27 = arith.constant 0.000000e+00 : f32
    %39 = vector.broadcast %cst_27 : f32 to vector<4x32xf32>
    %40 = arith.maximumf %36, %39 : vector<4x32xf32>
    %cst_28 = arith.constant 2.000000e-01 : f32
    %41 = vector.broadcast %cst_28 : f32 to vector<4x32xf32>
    %42 = arith.mulf %41, %40 : vector<4x32xf32>
    %43 = arith.addf %38, %42 : vector<4x32xf32>
    %c3 = arith.constant 3 : index
    %c0_29 = arith.constant 0 : index
    %c0_30 = arith.constant 0 : index
    %44 = vector.load %arg2[%c3, %c0_29, %c0_30] : memref<8x4x32xf32, #tpu.memory_space<vmem>>, vector<1x4x32xf32>
    %45 = vector.shape_cast %44 : vector<1x4x32xf32> to vector<4x32xf32>
    %46 = vector.shape_cast %43 : vector<4x32xf32> to vector<1x4x32xf32>
    tpu.vector_store %arg2[%c3, %c0_29, %c0_30], %46 {strides = array<i32>} : memref<8x4x32xf32, #tpu.memory_space<vmem>>, vector<1x4x32xf32>,
    %cst_31 = arith.constant dense<0.000000e+00> : vector<4x32xf32>
    %47 = tpu.matmul %43, %0, %cst_31 {dimension_numbers = #tpu.dot_dimension_numbers<[1], [0], [0], [1], [0, 0, 1, 1], [], []>} : vector<4x32xf32>, vector<32x32xf32>, vector<4x32xf32> -> vector<4x32xf32>
    %c3_32 = arith.constant 3 : index
    %c0_33 = arith.constant 0 : index
    %c0_34 = arith.constant 0 : index
    %48 = vector.load %arg0[%c3_32, %c0_33, %c0_34] : memref<8x4x32xf32, #tpu.memory_space<vmem>>, vector<1x4x32xf32>
    %49 = vector.shape_cast %48 : vector<1x4x32xf32> to vector<4x32xf32>
    %50 = arith.addf %47, %49 : vector<4x32xf32>
    %cst_35 = arith.constant 8.000000e-01 : f32
    %51 = vector.broadcast %cst_35 : f32 to vector<4x32xf32>
    %52 = arith.mulf %51, %43 : vector<4x32xf32>
    %cst_36 = arith.constant 0.000000e+00 : f32
    %53 = vector.broadcast %cst_36 : f32 to vector<4x32xf32>
    %54 = arith.maximumf %50, %53 : vector<4x32xf32>
    %cst_37 = arith.constant 2.000000e-01 : f32
    %55 = vector.broadcast %cst_37 : f32 to vector<4x32xf32>
    %56 = arith.mulf %55, %54 : vector<4x32xf32>
    %57 = arith.addf %52, %56 : vector<4x32xf32>
    %c4 = arith.constant 4 : index
    %c0_38 = arith.constant 0 : index
    %c0_39 = arith.constant 0 : index
    %58 = vector.load %arg2[%c4, %c0_38, %c0_39] : memref<8x4x32xf32, #tpu.memory_space<vmem>>, vector<1x4x32xf32>
    %59 = vector.shape_cast %58 : vector<1x4x32xf32> to vector<4x32xf32>
    %60 = vector.shape_cast %57 : vector<4x32xf32> to vector<1x4x32xf32>
    tpu.vector_store %arg2[%c4, %c0_38, %c0_39], %60 {strides = array<i32>} : memref<8x4x32xf32, #tpu.memory_space<vmem>>, vector<1x4x32xf32>,
    %cst_40 = arith.constant dense<0.000000e+00> : vector<4x32xf32>
    %61 = tpu.matmul %57, %0, %cst_40 {dimension_numbers = #tpu.dot_dimension_numbers<[1], [0], [0], [1], [0, 0, 1, 1], [], []>} : vector<4x32xf32>, vector<32x32xf32>, vector<4x32xf32> -> vector<4x32xf32>
    %c4_41 = arith.constant 4 : index
    %c0_42 = arith.constant 0 : index
    %c0_43 = arith.constant 0 : index
    %62 = vector.load %arg0[%c4_41, %c0_42, %c0_43] : memref<8x4x32xf32, #tpu.memory_space<vmem>>, vector<1x4x32xf32>
    %63 = vector.shape_cast %62 : vector<1x4x32xf32> to vector<4x32xf32>
    %64 = arith.addf %61, %63 : vector<4x32xf32>
    %cst_44 = arith.constant 8.000000e-01 : f32
    %65 = vector.broadcast %cst_44 : f32 to vector<4x32xf32>
    %66 = arith.mulf %65, %57 : vector<4x32xf32>
    %cst_45 = arith.constant 0.000000e+00 : f32
    %67 = vector.broadcast %cst_45 : f32 to vector<4x32xf32>
    %68 = arith.maximumf %64, %67 : vector<4x32xf32>
    %cst_46 = arith.constant 2.000000e-01 : f32
    %69 = vector.broadcast %cst_46 : f32 to vector<4x32xf32>
    %70 = arith.mulf %69, %68 : vector<4x32xf32>
    %71 = arith.addf %66, %70 : vector<4x32xf32>
    %c5 = arith.constant 5 : index
    %c0_47 = arith.constant 0 : index
    %c0_48 = arith.constant 0 : index
    %72 = vector.load %arg2[%c5, %c0_47, %c0_48] : memref<8x4x32xf32, #tpu.memory_space<vmem>>, vector<1x4x32xf32>
    %73 = vector.shape_cast %72 : vector<1x4x32xf32> to vector<4x32xf32>
    %74 = vector.shape_cast %71 : vector<4x32xf32> to vector<1x4x32xf32>
    tpu.vector_store %arg2[%c5, %c0_47, %c0_48], %74 {strides = array<i32>} : memref<8x4x32xf32, #tpu.memory_space<vmem>>, vector<1x4x32xf32>,
    %cst_49 = arith.constant dense<0.000000e+00> : vector<4x32xf32>
    %75 = tpu.matmul %71, %0, %cst_49 {dimension_numbers = #tpu.dot_dimension_numbers<[1], [0], [0], [1], [0, 0, 1, 1], [], []>} : vector<4x32xf32>, vector<32x32xf32>, vector<4x32xf32> -> vector<4x32xf32>
    %c5_50 = arith.constant 5 : index
    %c0_51 = arith.constant 0 : index
    %c0_52 = arith.constant 0 : index
    %76 = vector.load %arg0[%c5_50, %c0_51, %c0_52] : memref<8x4x32xf32, #tpu.memory_space<vmem>>, vector<1x4x32xf32>
    %77 = vector.shape_cast %76 : vector<1x4x32xf32> to vector<4x32xf32>
    %78 = arith.addf %75, %77 : vector<4x32xf32>
    %cst_53 = arith.constant 8.000000e-01 : f32
    %79 = vector.broadcast %cst_53 : f32 to vector<4x32xf32>
    %80 = arith.mulf %79, %71 : vector<4x32xf32>
    %cst_54 = arith.constant 0.000000e+00 : f32
    %81 = vector.broadcast %cst_54 : f32 to vector<4x32xf32>
    %82 = arith.maximumf %78, %81 : vector<4x32xf32>
    %cst_55 = arith.constant 2.000000e-01 : f32
    %83 = vector.broadcast %cst_55 : f32 to vector<4x32xf32>
    %84 = arith.mulf %83, %82 : vector<4x32xf32>
    %85 = arith.addf %80, %84 : vector<4x32xf32>
    %c6 = arith.constant 6 : index
    %c0_56 = arith.constant 0 : index
    %c0_57 = arith.constant 0 : index
    %86 = vector.load %arg2[%c6, %c0_56, %c0_57] : memref<8x4x32xf32, #tpu.memory_space<vmem>>, vector<1x4x32xf32>
    %87 = vector.shape_cast %86 : vector<1x4x32xf32> to vector<4x32xf32>
    %88 = vector.shape_cast %85 : vector<4x32xf32> to vector<1x4x32xf32>
    tpu.vector_store %arg2[%c6, %c0_56, %c0_57], %88 {strides = array<i32>} : memref<8x4x32xf32, #tpu.memory_space<vmem>>, vector<1x4x32xf32>,
    %cst_58 = arith.constant dense<0.000000e+00> : vector<4x32xf32>
    %89 = tpu.matmul %85, %0, %cst_58 {dimension_numbers = #tpu.dot_dimension_numbers<[1], [0], [0], [1], [0, 0, 1, 1], [], []>} : vector<4x32xf32>, vector<32x32xf32>, vector<4x32xf32> -> vector<4x32xf32>
    %c6_59 = arith.constant 6 : index
    %c0_60 = arith.constant 0 : index
    %c0_61 = arith.constant 0 : index
    %90 = vector.load %arg0[%c6_59, %c0_60, %c0_61] : memref<8x4x32xf32, #tpu.memory_space<vmem>>, vector<1x4x32xf32>
    %91 = vector.shape_cast %90 : vector<1x4x32xf32> to vector<4x32xf32>
    %92 = arith.addf %89, %91 : vector<4x32xf32>
    %cst_62 = arith.constant 8.000000e-01 : f32
    %93 = vector.broadcast %cst_62 : f32 to vector<4x32xf32>
    %94 = arith.mulf %93, %85 : vector<4x32xf32>
    %cst_63 = arith.constant 0.000000e+00 : f32
    %95 = vector.broadcast %cst_63 : f32 to vector<4x32xf32>
    %96 = arith.maximumf %92, %95 : vector<4x32xf32>
    %cst_64 = arith.constant 2.000000e-01 : f32
    %97 = vector.broadcast %cst_64 : f32 to vector<4x32xf32>
    %98 = arith.mulf %97, %96 : vector<4x32xf32>
    %99 = arith.addf %94, %98 : vector<4x32xf32>
    %c7 = arith.constant 7 : index
    %c0_65 = arith.constant 0 : index
    %c0_66 = arith.constant 0 : index
    %100 = vector.load %arg2[%c7, %c0_65, %c0_66] : memref<8x4x32xf32, #tpu.memory_space<vmem>>, vector<1x4x32xf32>
    %101 = vector.shape_cast %100 : vector<1x4x32xf32> to vector<4x32xf32>
    %102 = vector.shape_cast %99 : vector<4x32xf32> to vector<1x4x32xf32>
    tpu.vector_store %arg2[%c7, %c0_65, %c0_66], %102 {strides = array<i32>} : memref<8x4x32xf32, #tpu.memory_space<vmem>>, vector<1x4x32xf32>,
    return
  }
}

</mosaic_0001>

<llo_original>
// kernel: tpu_custom_call.1
$region0: #{tpu_custom_call.1}
  #allocation0 [shape = 'u32[]', space=smem, size = 0x4, offset = 0x4, fixed_abs, tag = 'smem constant byte address 0x4 - core index']
  #allocation1 [shape = 'u32[144,128]{1,0:T(1,128)}', space=vmem, size = 0x12000, scoped, tag = 'internal scratch']
  %s0 = inlined_call_operand.hbm [shape: f32[8,4,32], index: 0, kind: input, shape index: {}]
  %s1 = inlined_call_operand.hbm [shape: f32[32,32], index: 1, kind: input, shape index: {}]
  %s2 = inlined_call_operand.hbm [shape: f32[8,4,32], index: 2, kind: output, shape index: {}]
  %s3 = sld [smem:[#allocation0]]
  $region26: #{tpu_custom_call.1} parent=0
    _
  %s5 = ssub.s32 1, %s3
  %s6 = scalar_select 0, %s5, %s3
  $region1: #{tpu_custom_call.1} parent=0
    #allocation2 [shape = 'u8[16384]{0}', space=vmem, size = 0x4000, scoped, tag = 'input window, operand 0, single buffered']
    #allocation3 [shape = 's32[1]{0}', space=sflag, size = 0x4, scoped, tag = 'scoped memory for tpu_custom_call.1']
    #allocation4 [shape = 's32[1]{0}', space=sflag, size = 0x4, scoped, tag = 'scoped memory for tpu_custom_call.1']
    #allocation5 [shape = 'u8[16384]{0}', space=vmem, size = 0x4000, scoped, tag = 'input window, operand 1, single buffered']
    #allocation6 [shape = 's32[1]{0}', space=sflag, size = 0x4, scoped, tag = 'scoped memory for tpu_custom_call.1']
    #allocation7 [shape = 'u8[16384]{0}', space=vmem, size = 0x4000, scoped, tag = 'output window, operand 0, single buffered']
    %7 = vsyncpa [#allocation3], 0
    %8 = vsyncpa [#allocation6], 0
    %9 = vsyncpa [#allocation4], 0
    // Predicated region
    $region2: #{tpu_custom_call.1} parent=1 // pred_check
      _
    $region3: #{tpu_custom_call.1} parent=1 // pred_check_branch
      %11 = sbr.rel (0) target = $region5
    $region4: #{tpu_custom_call.1} parent=1 // pred_region
      %s13 = ssub.s32 512, 512
      %14 = vsyncadd [#allocation3], %s13
      %s15 = sshll.u32 [#allocation2], 4
      %s16 = int_to_ptr.vmem [resolvable:$true] %s15
      %21 = dma.hbm_to_vmem [thread:$0]  %s0, 512, %s16, [#allocation3], 64, 64, 4
    $region5: #{tpu_custom_call.1} parent=1 // pred_fallthru
      _
    // Predicated region
    $region6: #{tpu_custom_call.1} parent=1 // pred_check
      _
    $region7: #{tpu_custom_call.1} parent=1 // pred_check_branch
      %23 = sbr.rel (0) target = $region9
    $region8: #{tpu_custom_call.1} parent=1 // pred_region
      %s25 = ssub.s32 512, 512
      %26 = vsyncadd [#allocation6], %s25
      %s27 = sshll.u32 [#allocation5], 4
      %s28 = int_to_ptr.vmem [resolvable:$true] %s27
      %33 = dma.hbm_to_vmem [thread:$0]  %s1, 512, %s28, [#allocation6], 128, 128, 8
    $region9: #{tpu_custom_call.1} parent=1 // pred_fallthru
      _
    // Predicated region
    $region10: #{tpu_custom_call.1} parent=1 // pred_check
      _
    $region11: #{tpu_custom_call.1} parent=1 // pred_check_branch
      %35 = sbr.rel (0) target = $region13
    $region12: #{tpu_custom_call.1} parent=1 // pred_region
      %36 = dma.done [#allocation3], 512
    $region13: #{tpu_custom_call.1} parent=1 // pred_fallthru
      _
    // Predicated region
    $region14: #{tpu_custom_call.1} parent=1 // pred_check
      _
    $region15: #{tpu_custom_call.1} parent=1 // pred_check_branch
      %38 = sbr.rel (0) target = $region17
    $region16: #{tpu_custom_call.1} parent=1 // pred_region
      %39 = dma.done [#allocation6], 512
    $region17: #{tpu_custom_call.1} parent=1 // pred_fallthru
      _
    %v40 = vld [vmem:[#allocation5] sm:$0xff]
    %v41 = vld [vmem:[#allocation5 + $0x8] sm:$0xff]
    %v42 = vld [vmem:[#allocation5 + $0x10] sm:$0xff]
    %v43 = vld [vmem:[#allocation5 + $0x18] sm:$0xff]
    %vm44 = vcmask 257024
    %45 = vst.msk [vmem:[#allocation7] sm:$0xf] %vm44, 0.0
    %v46 = vld [vmem:[#allocation2] sm:$0xf]
    %vm47 = vcmask 261120
    %v49 = vsel %vm47, 0.0, 0
    %51 = vmatprep.subr.mxu0 0.0
    %52 = vmatpush1.msra.mxu0 %v40
    %53 = vmatprep.subr.mxu0 0.0
    %54 = vmatpush1.msra.mxu0 %v41
    %55 = vmatprep.subr.mxu0 0.0
    %56 = vmatpush1.msra.mxu0 %v42
    %57 = vmatprep.subr.mxu0 0.0
    %58 = vmatpush1.msra.mxu0 %v43
    %59 = vmatprep.subr.mxu0 0.0
    %60 = vmatpush1.msra.mxu0 0.0
    %61 = vmatprep.subr.mxu0 0.0
    %62 = vmatpush1.msra.mxu0 0.0
    %63 = vmatprep.subr.mxu0 0.0
    %64 = vmatpush1.msra.mxu0 0.0
    %65 = vmatprep.subr.mxu0 0.0
    %66 = vmatpush1.msra.mxu0 0.0
    %67 = vmatprep.subr.mxu0 0.0
    %68 = vmatpush1.msra.mxu0 0.0
    %69 = vmatprep.subr.mxu0 0.0
    %70 = vmatpush1.msra.mxu0 0.0
    %71 = vmatprep.subr.mxu0 0.0
    %72 = vmatpush1.msra.mxu0 0.0
    %73 = vmatprep.subr.mxu0 0.0
    %74 = vmatpush1.msra.mxu0 0.0
    %75 = vmatprep.subr.mxu0 0.0
    %76 = vmatpush1.msra.mxu0 0.0
    %77 = vmatprep.subr.mxu0 0.0
    %78 = vmatpush1.msra.mxu0 0.0
    %79 = vmatprep.subr.mxu0 0.0
    %80 = vmatpush1.msra.mxu0 0.0
    %81 = vmatprep.subr.mxu0 0.0
    %82 = vmatpush1.msra.mxu0 0.0
    %83 = vmatprep.subr.mxu0 0.0
    %84 = vmatpush1.msra.mxu0 0.0
    %85 = vmatprep.subr.mxu0 0.0
    %86 = vmatpush1.msra.mxu0 0.0
    %87 = vmatprep.subr.mxu0 0.0
    %88 = vmatpush1.msra.mxu0 0.0
    %89 = vmatprep.subr.mxu0 0.0
    %90 = vmatpush1.msra.mxu0 0.0
    %91 = vmatprep.subr.mxu0 0.0
    %92 = vmatpush1.msra.mxu0 0.0
    %93 = vmatprep.subr.mxu0 0.0
    %94 = vmatpush1.msra.mxu0 0.0
    %95 = vmatprep.subr.mxu0 0.0
    %96 = vmatpush1.msra.mxu0 0.0
    %97 = vmatprep.subr.mxu0 0.0
    %98 = vmatpush1.msra.mxu0 0.0
    %99 = vmatprep.subr.mxu0 0.0
    %100 = vmatpush1.msra.mxu0 0.0
    %101 = vmatprep.subr.mxu0 0.0
    %102 = vmatpush1.msra.mxu0 0.0
    %103 = vmatprep.subr.mxu0 0.0
    %104 = vmatpush1.msra.mxu0 0.0
    %105 = vmatprep.subr.mxu0 0.0
    %106 = vmatpush1.msra.mxu0 0.0
    %107 = vmatprep.subr.mxu0 0.0
    %108 = vmatpush1.msra.mxu0 0.0
    %109 = vmatprep.subr.mxu0 0.0
    %110 = vmatpush1.msra.mxu0 0.0
    %111 = vmatprep.subr.mxu0 0.0
    %112 = vmatpush1.msra.mxu0 0.0
    %113 = vmatprep.subr.mxu0 0.0
    %114 = vmatpush1.msra.mxu0 0.0
    %115 = vmatprep.mubr.f32.mxu0 0.0
    %116 = vmatmul.mubr.f32.gmra.mrb[0].mxu0 %v49
    %v117 = vpop.f32.mrb[0].mxu0
    %v118 = vadd.f32 %v46, %v117
    %v119 = vpop.f32.mrb[0].mxu0
    %120 = vdwg.mxu0
    %v121 = vmax.f32 %v118, 0.0
    %v122 = vmul.f32 %v121, 0.2
    %v123 = vadd.f32 %v122, 0.0
    %s124 = scalar_lea.vmem [#allocation7], 4
    %125 = vst.msk [vmem:[%s124] sm:$0xf] %vm44, %v123
    %s126 = scalar_lea.vmem [#allocation2], 4
    %v127 = vld [vmem:[%s126] sm:$0xf]
    %v129 = vsel %vm47, %v123, 0
    %131 = vmatprep.subr.mxu0 0.0
    %132 = vmatpush1.msra.mxu0 %v40
    %133 = vmatprep.subr.mxu0 0.0
    %134 = vmatpush1.msra.mxu0 %v41
    %135 = vmatprep.subr.mxu0 0.0
    %136 = vmatpush1.msra.mxu0 %v42
    %137 = vmatprep.subr.mxu0 0.0
    %138 = vmatpush1.msra.mxu0 %v43
    %139 = vmatprep.subr.mxu0 0.0
    %140 = vmatpush1.msra.mxu0 0.0
    %141 = vmatprep.subr.mxu0 0.0
    %142 = vmatpush1.msra.mxu0 0.0
    %143 = vmatprep.subr.mxu0 0.0
    %144 = vmatpush1.msra.mxu0 0.0
    %145 = vmatprep.subr.mxu0 0.0
    %146 = vmatpush1.msra.mxu0 0.0
    %147 = vmatprep.subr.mxu0 0.0
    %148 = vmatpush1.msra.mxu0 0.0
    %149 = vmatprep.subr.mxu0 0.0
    %150 = vmatpush1.msra.mxu0 0.0
    %151 = vmatprep.subr.mxu0 0.0
    %152 = vmatpush1.msra.mxu0 0.0
    %153 = vmatprep.subr.mxu0 0.0
    %154 = vmatpush1.msra.mxu0 0.0
    %155 = vmatprep.subr.mxu0 0.0
    %156 = vmatpush1.msra.mxu0 0.0
    %157 = vmatprep.subr.mxu0 0.0
    %158 = vmatpush1.msra.mxu0 0.0
    %159 = vmatprep.subr.mxu0 0.0
    %160 = vmatpush1.msra.mxu0 0.0
    %161 = vmatprep.subr.mxu0 0.0
    %162 = vmatpush1.msra.mxu0 0.0
    %163 = vmatprep.subr.mxu0 0.0
    %164 = vmatpush1.msra.mxu0 0.0
    %165 = vmatprep.subr.mxu0 0.0
    %166 = vmatpush1.msra.mxu0 0.0
    %167 = vmatprep.subr.mxu0 0.0
    %168 = vmatpush1.msra.mxu0 0.0
    %169 = vmatprep.subr.mxu0 0.0
    %170 = vmatpush1.msra.mxu0 0.0
    %171 = vmatprep.subr.mxu0 0.0
    %172 = vmatpush1.msra.mxu0 0.0
    %173 = vmatprep.subr.mxu0 0.0
    %174 = vmatpush1.msra.mxu0 0.0
    %175 = vmatprep.subr.mxu0 0.0
    %176 = vmatpush1.msra.mxu0 0.0
    %177 = vmatprep.subr.mxu0 0.0
    %178 = vmatpush1.msra.mxu0 0.0
    %179 = vmatprep.subr.mxu0 0.0
    %180 = vmatpush1.msra.mxu0 0.0
    %181 = vmatprep.subr.mxu0 0.0
    %182 = vmatpush1.msra.mxu0 0.0
    %183 = vmatprep.subr.mxu0 0.0
    %184 = vmatpush1.msra.mxu0 0.0
    %185 = vmatprep.subr.mxu0 0.0
    %186 = vmatpush1.msra.mxu0 0.0
    %187 = vmatprep.subr.mxu0 0.0
    %188 = vmatpush1.msra.mxu0 0.0
    %189 = vmatprep.subr.mxu0 0.0
    %190 = vmatpush1.msra.mxu0 0.0
    %191 = vmatprep.subr.mxu0 0.0
    %192 = vmatpush1.msra.mxu0 0.0
    %193 = vmatprep.subr.mxu0 0.0
    %194 = vmatpush1.msra.mxu0 0.0
    %195 = vmatprep.mubr.f32.mxu0 0.0
    %196 = vmatmul.mubr.f32.gmra.mrb[0].mxu0 %v129
    %v197 = vpop.f32.mrb[0].mxu0
    %v198 = vadd.f32 %v127, %v197
    %v199 = vpop.f32.mrb[0].mxu0
    %200 = vdwg.mxu0
    %v201 = vmul.f32 %v123, 0.8
    %v202 = vmax.f32 %v198, 0.0
    %v203 = vmul.f32 %v202, 0.2
    %v204 = vadd.f32 %v201, %v203
    %s205 = scalar_lea.vmem [#allocation7], 8
    %206 = vst.msk [vmem:[%s205] sm:$0xf] %vm44, %v204
    %s207 = scalar_lea.vmem [#allocation2], 8
    %v208 = vld [vmem:[%s207] sm:$0xf]
    %v210 = vsel %vm47, %v204, 0
    %212 = vmatprep.subr.mxu0 0.0
    %213 = vmatpush1.msra.mxu0 %v40
    %214 = vmatprep.subr.mxu0 0.0
    %215 = vmatpush1.msra.mxu0 %v41
    %216 = vmatprep.subr.mxu0 0.0
    %217 = vmatpush1.msra.mxu0 %v42
    %218 = vmatprep.subr.mxu0 0.0
    %219 = vmatpush1.msra.mxu0 %v43
    %220 = vmatprep.subr.mxu0 0.0
    %221 = vmatpush1.msra.mxu0 0.0
    %222 = vmatprep.subr.mxu0 0.0
    %223 = vmatpush1.msra.mxu0 0.0
    %224 = vmatprep.subr.mxu0 0.0
    %225 = vmatpush1.msra.mxu0 0.0
    %226 = vmatprep.subr.mxu0 0.0
    %227 = vmatpush1.msra.mxu0 0.0
    %228 = vmatprep.subr.mxu0 0.0
    %229 = vmatpush1.msra.mxu0 0.0
    %230 = vmatprep.subr.mxu0 0.0
    %231 = vmatpush1.msra.mxu0 0.0
    %232 = vmatprep.subr.mxu0 0.0
    %233 = vmatpush1.msra.mxu0 0.0
    %234 = vmatprep.subr.mxu0 0.0
    %235 = vmatpush1.msra.mxu0 0.0
    %236 = vmatprep.subr.mxu0 0.0
    %237 = vmatpush1.msra.mxu0 0.0
    %238 = vmatprep.subr.mxu0 0.0
    %239 = vmatpush1.msra.mxu0 0.0
    %240 = vmatprep.subr.mxu0 0.0
    %241 = vmatpush1.msra.mxu0 0.0
    %242 = vmatprep.subr.mxu0 0.0
    %243 = vmatpush1.msra.mxu0 0.0
    %244 = vmatprep.subr.mxu0 0.0
    %245 = vmatpush1.msra.mxu0 0.0
    %246 = vmatprep.subr.mxu0 0.0
    %247 = vmatpush1.msra.mxu0 0.0
    %248 = vmatprep.subr.mxu0 0.0
    %249 = vmatpush1.msra.mxu0 0.0
    %250 = vmatprep.subr.mxu0 0.0
    %251 = vmatpush1.msra.mxu0 0.0
    %252 = vmatprep.subr.mxu0 0.0
    %253 = vmatpush1.msra.mxu0 0.0
    %254 = vmatprep.subr.mxu0 0.0
    %255 = vmatpush1.msra.mxu0 0.0
    %256 = vmatprep.subr.mxu0 0.0
    %257 = vmatpush1.msra.mxu0 0.0
    %258 = vmatprep.subr.mxu0 0.0
    %259 = vmatpush1.msra.mxu0 0.0
    %260 = vmatprep.subr.mxu0 0.0
    %261 = vmatpush1.msra.mxu0 0.0
    %262 = vmatprep.subr.mxu0 0.0
    %263 = vmatpush1.msra.mxu0 0.0
    %264 = vmatprep.subr.mxu0 0.0
    %265 = vmatpush1.msra.mxu0 0.0
    %266 = vmatprep.subr.mxu0 0.0
    %267 = vmatpush1.msra.mxu0 0.0
    %268 = vmatprep.subr.mxu0 0.0
    %269 = vmatpush1.msra.mxu0 0.0
    %270 = vmatprep.subr.mxu0 0.0
    %271 = vmatpush1.msra.mxu0 0.0
    %272 = vmatprep.subr.mxu0 0.0
    %273 = vmatpush1.msra.mxu0 0.0
    %274 = vmatprep.subr.mxu0 0.0
    %275 = vmatpush1.msra.mxu0 0.0
    %276 = vmatprep.mubr.f32.mxu0 0.0
    %277 = vmatmul.mubr.f32.gmra.mrb[0].mxu0 %v210
    %v278 = vpop.f32.mrb[0].mxu0
    %v279 = vadd.f32 %v208, %v278
    %v280 = vpop.f32.mrb[0].mxu0
    %281 = vdwg.mxu0
    %v282 = vmul.f32 %v204, 0.8
    %v283 = vmax.f32 %v279, 0.0
    %v284 = vmul.f32 %v283, 0.2
    %v285 = vadd.f32 %v282, %v284
    %s286 = scalar_lea.vmem [#allocation7], 12
    %287 = vst.msk [vmem:[%s286] sm:$0xf] %vm44, %v285
    %s288 = scalar_lea.vmem [#allocation2], 12
    %v289 = vld [vmem:[%s288] sm:$0xf]
    %v291 = vsel %vm47, %v285, 0
    %293 = vmatprep.subr.mxu0 0.0
    %294 = vmatpush1.msra.mxu0 %v40
    %295 = vmatprep.subr.mxu0 0.0
    %296 = vmatpush1.msra.mxu0 %v41
    %297 = vmatprep.subr.mxu0 0.0
    %298 = vmatpush1.msra.mxu0 %v42
    %299 = vmatprep.subr.mxu0 0.0
    %300 = vmatpush1.msra.mxu0 %v43
    %301 = vmatprep.subr.mxu0 0.0
    %302 = vmatpush1.msra.mxu0 0.0
    %303 = vmatprep.subr.mxu0 0.0
    %304 = vmatpush1.msra.mxu0 0.0
    %305 = vmatprep.subr.mxu0 0.0
    %306 = vmatpush1.msra.mxu0 0.0
    %307 = vmatprep.subr.mxu0 0.0
    %308 = vmatpush1.msra.mxu0 0.0
    %309 = vmatprep.subr.mxu0 0.0
    %310 = vmatpush1.msra.mxu0 0.0
    %311 = vmatprep.subr.mxu0 0.0
    %312 = vmatpush1.msra.mxu0 0.0
    %313 = vmatprep.subr.mxu0 0.0
    %314 = vmatpush1.msra.mxu0 0.0
    %315 = vmatprep.subr.mxu0 0.0
    %316 = vmatpush1.msra.mxu0 0.0
    %317 = vmatprep.subr.mxu0 0.0
    %318 = vmatpush1.msra.mxu0 0.0
    %319 = vmatprep.subr.mxu0 0.0
    %320 = vmatpush1.msra.mxu0 0.0
    %321 = vmatprep.subr.mxu0 0.0
    %322 = vmatpush1.msra.mxu0 0.0
    %323 = vmatprep.subr.mxu0 0.0
    %324 = vmatpush1.msra.mxu0 0.0
    %325 = vmatprep.subr.mxu0 0.0
    %326 = vmatpush1.msra.mxu0 0.0
    %327 = vmatprep.subr.mxu0 0.0
    %328 = vmatpush1.msra.mxu0 0.0
    %329 = vmatprep.subr.mxu0 0.0
    %330 = vmatpush1.msra.mxu0 0.0
    %331 = vmatprep.subr.mxu0 0.0
    %332 = vmatpush1.msra.mxu0 0.0
    %333 = vmatprep.subr.mxu0 0.0
    %334 = vmatpush1.msra.mxu0 0.0
    %335 = vmatprep.subr.mxu0 0.0
    %336 = vmatpush1.msra.mxu0 0.0
    %337 = vmatprep.subr.mxu0 0.0
    %338 = vmatpush1.msra.mxu0 0.0
    %339 = vmatprep.subr.mxu0 0.0
    %340 = vmatpush1.msra.mxu0 0.0
    %341 = vmatprep.subr.mxu0 0.0
    %342 = vmatpush1.msra.mxu0 0.0
    %343 = vmatprep.subr.mxu0 0.0
    %344 = vmatpush1.msra.mxu0 0.0
    %345 = vmatprep.subr.mxu0 0.0
    %346 = vmatpush1.msra.mxu0 0.0
    %347 = vmatprep.subr.mxu0 0.0
    %348 = vmatpush1.msra.mxu0 0.0
    %349 = vmatprep.subr.mxu0 0.0
    %350 = vmatpush1.msra.mxu0 0.0
    %351 = vmatprep.subr.mxu0 0.0
    %352 = vmatpush1.msra.mxu0 0.0
    %353 = vmatprep.subr.mxu0 0.0
    %354 = vmatpush1.msra.mxu0 0.0
    %355 = vmatprep.subr.mxu0 0.0
    %356 = vmatpush1.msra.mxu0 0.0
    %357 = vmatprep.mubr.f32.mxu0 0.0
    %358 = vmatmul.mubr.f32.gmra.mrb[0].mxu0 %v291
    %v359 = vpop.f32.mrb[0].mxu0
    %v360 = vadd.f32 %v289, %v359
    %v361 = vpop.f32.mrb[0].mxu0
    %362 = vdwg.mxu0
    %v363 = vmul.f32 %v285, 0.8
    %v364 = vmax.f32 %v360, 0.0
    %v365 = vmul.f32 %v364, 0.2
    %v366 = vadd.f32 %v363, %v365
    %s367 = scalar_lea.vmem [#allocation7], 16
    %368 = vst.msk [vmem:[%s367] sm:$0xf] %vm44, %v366
    %s369 = scalar_lea.vmem [#allocation2], 16
    %v370 = vld [vmem:[%s369] sm:$0xf]
    %v372 = vsel %vm47, %v366, 0
    %374 = vmatprep.subr.mxu0 0.0
    %375 = vmatpush1.msra.mxu0 %v40
    %376 = vmatprep.subr.mxu0 0.0
    %377 = vmatpush1.msra.mxu0 %v41
    %378 = vmatprep.subr.mxu0 0.0
    %379 = vmatpush1.msra.mxu0 %v42
    %380 = vmatprep.subr.mxu0 0.0
    %381 = vmatpush1.msra.mxu0 %v43
    %382 = vmatprep.subr.mxu0 0.0
    %383 = vmatpush1.msra.mxu0 0.0
    %384 = vmatprep.subr.mxu0 0.0
    %385 = vmatpush1.msra.mxu0 0.0
    %386 = vmatprep.subr.mxu0 0.0
    %387 = vmatpush1.msra.mxu0 0.0
    %388 = vmatprep.subr.mxu0 0.0
    %389 = vmatpush1.msra.mxu0 0.0
    %390 = vmatprep.subr.mxu0 0.0
    %391 = vmatpush1.msra.mxu0 0.0
    %392 = vmatprep.subr.mxu0 0.0
    %393 = vmatpush1.msra.mxu0 0.0
    %394 = vmatprep.subr.mxu0 0.0
    %395 = vmatpush1.msra.mxu0 0.0
    %396 = vmatprep.subr.mxu0 0.0
    %397 = vmatpush1.msra.mxu0 0.0
    %398 = vmatprep.subr.mxu0 0.0
    %399 = vmatpush1.msra.mxu0 0.0
    %400 = vmatprep.subr.mxu0 0.0
    %401 = vmatpush1.msra.mxu0 0.0
    %402 = vmatprep.subr.mxu0 0.0
    %403 = vmatpush1.msra.mxu0 0.0
    %404 = vmatprep.subr.mxu0 0.0
    %405 = vmatpush1.msra.mxu0 0.0
    %406 = vmatprep.subr.mxu0 0.0
    %407 = vmatpush1.msra.mxu0 0.0
    %408 = vmatprep.subr.mxu0 0.0
    %409 = vmatpush1.msra.mxu0 0.0
    %410 = vmatprep.subr.mxu0 0.0
    %411 = vmatpush1.msra.mxu0 0.0
    %412 = vmatprep.subr.mxu0 0.0
    %413 = vmatpush1.msra.mxu0 0.0
    %414 = vmatprep.subr.mxu0 0.0
    %415 = vmatpush1.msra.mxu0 0.0
    %416 = vmatprep.subr.mxu0 0.0
    %417 = vmatpush1.msra.mxu0 0.0
    %418 = vmatprep.subr.mxu0 0.0
    %419 = vmatpush1.msra.mxu0 0.0
    %420 = vmatprep.subr.mxu0 0.0
    %421 = vmatpush1.msra.mxu0 0.0
    %422 = vmatprep.subr.mxu0 0.0
    %423 = vmatpush1.msra.mxu0 0.0
    %424 = vmatprep.subr.mxu0 0.0
    %425 = vmatpush1.msra.mxu0 0.0
    %426 = vmatprep.subr.mxu0 0.0
    %427 = vmatpush1.msra.mxu0 0.0
    %428 = vmatprep.subr.mxu0 0.0
    %429 = vmatpush1.msra.mxu0 0.0
    %430 = vmatprep.subr.mxu0 0.0
    %431 = vmatpush1.msra.mxu0 0.0
    %432 = vmatprep.subr.mxu0 0.0
    %433 = vmatpush1.msra.mxu0 0.0
    %434 = vmatprep.subr.mxu0 0.0
    %435 = vmatpush1.msra.mxu0 0.0
    %436 = vmatprep.subr.mxu0 0.0
    %437 = vmatpush1.msra.mxu0 0.0
    %438 = vmatprep.mubr.f32.mxu0 0.0
    %439 = vmatmul.mubr.f32.gmra.mrb[0].mxu0 %v372
    %v440 = vpop.f32.mrb[0].mxu0
    %v441 = vadd.f32 %v370, %v440
    %v442 = vpop.f32.mrb[0].mxu0
    %443 = vdwg.mxu0
    %v444 = vmul.f32 %v366, 0.8
    %v445 = vmax.f32 %v441, 0.0
    %v446 = vmul.f32 %v445, 0.2
    %v447 = vadd.f32 %v444, %v446
    %s448 = scalar_lea.vmem [#allocation7], 20
    %449 = vst.msk [vmem:[%s448] sm:$0xf] %vm44, %v447
    %s450 = scalar_lea.vmem [#allocation2], 20
    %v451 = vld [vmem:[%s450] sm:$0xf]
    %v453 = vsel %vm47, %v447, 0
    %455 = vmatprep.subr.mxu0 0.0
    %456 = vmatpush1.msra.mxu0 %v40
    %457 = vmatprep.subr.mxu0 0.0
    %458 = vmatpush1.msra.mxu0 %v41
    %459 = vmatprep.subr.mxu0 0.0
    %460 = vmatpush1.msra.mxu0 %v42
    %461 = vmatprep.subr.mxu0 0.0
    %462 = vmatpush1.msra.mxu0 %v43
    %463 = vmatprep.subr.mxu0 0.0
    %464 = vmatpush1.msra.mxu0 0.0
    %465 = vmatprep.subr.mxu0 0.0
    %466 = vmatpush1.msra.mxu0 0.0
    %467 = vmatprep.subr.mxu0 0.0
    %468 = vmatpush1.msra.mxu0 0.0
    %469 = vmatprep.subr.mxu0 0.0
    %470 = vmatpush1.msra.mxu0 0.0
    %471 = vmatprep.subr.mxu0 0.0
    %472 = vmatpush1.msra.mxu0 0.0
    %473 = vmatprep.subr.mxu0 0.0
    %474 = vmatpush1.msra.mxu0 0.0
    %475 = vmatprep.subr.mxu0 0.0
    %476 = vmatpush1.msra.mxu0 0.0
    %477 = vmatprep.subr.mxu0 0.0
    %478 = vmatpush1.msra.mxu0 0.0
    %479 = vmatprep.subr.mxu0 0.0
    %480 = vmatpush1.msra.mxu0 0.0
    %481 = vmatprep.subr.mxu0 0.0
    %482 = vmatpush1.msra.mxu0 0.0
    %483 = vmatprep.subr.mxu0 0.0
    %484 = vmatpush1.msra.mxu0 0.0
    %485 = vmatprep.subr.mxu0 0.0
    %486 = vmatpush1.msra.mxu0 0.0
    %487 = vmatprep.subr.mxu0 0.0
    %488 = vmatpush1.msra.mxu0 0.0
    %489 = vmatprep.subr.mxu0 0.0
    %490 = vmatpush1.msra.mxu0 0.0
    %491 = vmatprep.subr.mxu0 0.0
    %492 = vmatpush1.msra.mxu0 0.0
    %493 = vmatprep.subr.mxu0 0.0
    %494 = vmatpush1.msra.mxu0 0.0
    %495 = vmatprep.subr.mxu0 0.0
    %496 = vmatpush1.msra.mxu0 0.0
    %497 = vmatprep.subr.mxu0 0.0
    %498 = vmatpush1.msra.mxu0 0.0
    %499 = vmatprep.subr.mxu0 0.0
    %500 = vmatpush1.msra.mxu0 0.0
    %501 = vmatprep.subr.mxu0 0.0
    %502 = vmatpush1.msra.mxu0 0.0
    %503 = vmatprep.subr.mxu0 0.0
    %504 = vmatpush1.msra.mxu0 0.0
    %505 = vmatprep.subr.mxu0 0.0
    %506 = vmatpush1.msra.mxu0 0.0
    %507 = vmatprep.subr.mxu0 0.0
    %508 = vmatpush1.msra.mxu0 0.0
    %509 = vmatprep.subr.mxu0 0.0
    %510 = vmatpush1.msra.mxu0 0.0
    %511 = vmatprep.subr.mxu0 0.0
    %512 = vmatpush1.msra.mxu0 0.0
    %513 = vmatprep.subr.mxu0 0.0
    %514 = vmatpush1.msra.mxu0 0.0
    %515 = vmatprep.subr.mxu0 0.0
    %516 = vmatpush1.msra.mxu0 0.0
    %517 = vmatprep.subr.mxu0 0.0
    %518 = vmatpush1.msra.mxu0 0.0
    %519 = vmatprep.mubr.f32.mxu0 0.0
    %520 = vmatmul.mubr.f32.gmra.mrb[0].mxu0 %v453
    %v521 = vpop.f32.mrb[0].mxu0
    %v522 = vadd.f32 %v451, %v521
    %v523 = vpop.f32.mrb[0].mxu0
    %524 = vdwg.mxu0
    %v525 = vmul.f32 %v447, 0.8
    %v526 = vmax.f32 %v522, 0.0
    %v527 = vmul.f32 %v526, 0.2
    %v528 = vadd.f32 %v525, %v527
    %s529 = scalar_lea.vmem [#allocation7], 24
    %530 = vst.msk [vmem:[%s529] sm:$0xf] %vm44, %v528
    %s531 = scalar_lea.vmem [#allocation2], 24
    %v532 = vld [vmem:[%s531] sm:$0xf]
    %v534 = vsel %vm47, %v528, 0
    %536 = vmatprep.subr.mxu0 0.0
    %537 = vmatpush1.msra.mxu0 %v40
    %538 = vmatprep.subr.mxu0 0.0
    %539 = vmatpush1.msra.mxu0 %v41
    %540 = vmatprep.subr.mxu0 0.0
    %541 = vmatpush1.msra.mxu0 %v42
    %542 = vmatprep.subr.mxu0 0.0
    %543 = vmatpush1.msra.mxu0 %v43
    %544 = vmatprep.subr.mxu0 0.0
    %545 = vmatpush1.msra.mxu0 0.0
    %546 = vmatprep.subr.mxu0 0.0
    %547 = vmatpush1.msra.mxu0 0.0
    %548 = vmatprep.subr.mxu0 0.0
    %549 = vmatpush1.msra.mxu0 0.0
    %550 = vmatprep.subr.mxu0 0.0
    %551 = vmatpush1.msra.mxu0 0.0
    %552 = vmatprep.subr.mxu0 0.0
    %553 = vmatpush1.msra.mxu0 0.0
    %554 = vmatprep.subr.mxu0 0.0
    %555 = vmatpush1.msra.mxu0 0.0
    %556 = vmatprep.subr.mxu0 0.0
    %557 = vmatpush1.msra.mxu0 0.0
    %558 = vmatprep.subr.mxu0 0.0
    %559 = vmatpush1.msra.mxu0 0.0
    %560 = vmatprep.subr.mxu0 0.0
    %561 = vmatpush1.msra.mxu0 0.0
    %562 = vmatprep.subr.mxu0 0.0
    %563 = vmatpush1.msra.mxu0 0.0
    %564 = vmatprep.subr.mxu0 0.0
    %565 = vmatpush1.msra.mxu0 0.0
    %566 = vmatprep.subr.mxu0 0.0
    %567 = vmatpush1.msra.mxu0 0.0
    %568 = vmatprep.subr.mxu0 0.0
    %569 = vmatpush1.msra.mxu0 0.0
    %570 = vmatprep.subr.mxu0 0.0
    %571 = vmatpush1.msra.mxu0 0.0
    %572 = vmatprep.subr.mxu0 0.0
    %573 = vmatpush1.msra.mxu0 0.0
    %574 = vmatprep.subr.mxu0 0.0
    %575 = vmatpush1.msra.mxu0 0.0
    %576 = vmatprep.subr.mxu0 0.0
    %577 = vmatpush1.msra.mxu0 0.0
    %578 = vmatprep.subr.mxu0 0.0
    %579 = vmatpush1.msra.mxu0 0.0
    %580 = vmatprep.subr.mxu0 0.0
    %581 = vmatpush1.msra.mxu0 0.0
    %582 = vmatprep.subr.mxu0 0.0
    %583 = vmatpush1.msra.mxu0 0.0
    %584 = vmatprep.subr.mxu0 0.0
    %585 = vmatpush1.msra.mxu0 0.0
    %586 = vmatprep.subr.mxu0 0.0
    %587 = vmatpush1.msra.mxu0 0.0
    %588 = vmatprep.subr.mxu0 0.0
    %589 = vmatpush1.msra.mxu0 0.0
    %590 = vmatprep.subr.mxu0 0.0
    %591 = vmatpush1.msra.mxu0 0.0
    %592 = vmatprep.subr.mxu0 0.0
    %593 = vmatpush1.msra.mxu0 0.0
    %594 = vmatprep.subr.mxu0 0.0
    %595 = vmatpush1.msra.mxu0 0.0
    %596 = vmatprep.subr.mxu0 0.0
    %597 = vmatpush1.msra.mxu0 0.0
    %598 = vmatprep.subr.mxu0 0.0
    %599 = vmatpush1.msra.mxu0 0.0
    %600 = vmatprep.mubr.f32.mxu0 0.0
    %601 = vmatmul.mubr.f32.gmra.mrb[0].mxu0 %v534
    %v602 = vpop.f32.mrb[0].mxu0
    %v603 = vadd.f32 %v532, %v602
    %v604 = vpop.f32.mrb[0].mxu0
    %605 = vdwg.mxu0
    %v606 = vmul.f32 %v528, 0.8
    %v607 = vmax.f32 %v603, 0.0
    %v608 = vmul.f32 %v607, 0.2
    %v609 = vadd.f32 %v606, %v608
    %s610 = scalar_lea.vmem [#allocation7], 28
    %611 = vst.msk [vmem:[%s610] sm:$0xf] %vm44, %v609
    // Predicated region
    $region18: #{tpu_custom_call.1} parent=1 // pred_check
      _
    $region19: #{tpu_custom_call.1} parent=1 // pred_check_branch
      %613 = sbr.rel (0) target = $region21
    $region20: #{tpu_custom_call.1} parent=1 // pred_region
      %s615 = ssub.s32 512, 512
      %616 = vsyncadd [#allocation4], %s615
      %s617 = sshll.u32 [#allocation7], 4
      %s618 = int_to_ptr.vmem [resolvable:$true] %s617
      %623 = dma.vmem_to_hbm [thread:$0]  %s618, 512, %s2, [#allocation4], 64, 64, 4
    $region21: #{tpu_custom_call.1} parent=1 // pred_fallthru
      _
    // Predicated region
    $region22: #{tpu_custom_call.1} parent=1 // pred_check
      _
    $region23: #{tpu_custom_call.1} parent=1 // pred_check_branch
      %625 = sbr.rel (0) target = $region25
    $region24: #{tpu_custom_call.1} parent=1 // pred_region
      %626 = dma.done [#allocation4], 512
    $region25: #{tpu_custom_call.1} parent=1 // pred_fallthru
      _
    %627 = vsyncpa [#allocation3], 1
    %628 = vsyncpa [#allocation6], 1
    %629 = vsyncpa [#allocation4], 1

</llo_original>
